<compile_context>
chip_gen: v5e
topology: v5e:2x2
jax: 0.10.0
libtpu: 0.0.40
codegen_flags: <defaults>
</compile_context>

<pallas_src>
import functools

import jax
import jax.numpy as jnp
from jax.experimental import pallas as pl
from jax.experimental.pallas import tpu as pltpu

_SUBLANE = 8                      # f32 rows per vreg sublane group
_VMEM_TABLE_BUDGET = 48 << 20     # conservative: safe on v7x's 64 MiB VMEM


# ----------------------------------------------------------------------------
# Primary kernel: table resident in VMEM, batch-blocked gather.
# ----------------------------------------------------------------------------
def _resident_gather_kernel(labels_ref, table_ref, out_ref, *, block_rows):
    """Gather `block_rows` embedding rows for grid step `b`.

    labels_ref: SMEM (B_pad,) int32 scalar-prefetch (read as scalars here)
    table_ref : VMEM (L, H)  -- constant block index => resident across steps
    out_ref   : VMEM (block_rows, H) -- one dense, tile-aligned store
    """
    b = pl.program_id(0)
    rows = []
    for r in range(block_rows):                       # static, small unroll
        idx = labels_ref[b * block_rows + r]          # scalar label from SMEM
        rows.append(table_ref[pl.ds(idx, 1), :])      # dynamic (1, H) row read
    out_ref[...] = jnp.concatenate(rows, axis=0)      # single (TB, H) store


# ----------------------------------------------------------------------------
# Fallback kernel (huge tables only): scalar-prefetch-driven per-row DMA.
# ----------------------------------------------------------------------------
def _rowdma_gather_kernel(labels_ref, row_ref, out_ref):
    del labels_ref  # consumed by the BlockSpec index_map only
    out_ref[...] = row_ref[...]


def pallas_embedding_lookup(labels, table):
    """labels: (B,) int, table: (L, H) float32 -> (B, H) float32."""
    B = labels.shape[0]
    L, H = table.shape

    # Clamp so untrusted labels cannot drive an out-of-bounds access.
    # (torch.nn.Embedding raises; we clamp to the nearest valid row.)
    labels_i32 = jnp.clip(labels.astype(jnp.int32), 0, L - 1)

    table_bytes = L * H * jnp.dtype(table.dtype).itemsize

    if table_bytes <= _VMEM_TABLE_BUDGET:
        # --- Resident-table batch-blocked gather (fast path) ---------------
        TB = _SUBLANE
        B_pad = ((B + TB - 1) // TB) * TB
        if B_pad != B:
            labels_i32 = jnp.concatenate(
                [labels_i32, jnp.zeros((B_pad - B,), jnp.int32)])

        out_block_bytes = TB * H * jnp.dtype(table.dtype).itemsize
        cp_kwargs = {"dimension_semantics": ("parallel",)}
        if table_bytes > (8 << 20):
            # Raise the scoped-VMEM limit only when the default might reject
            # a resident table; leave generous headroom for double-buffering.
            cp_kwargs["vmem_limit_bytes"] = min(
                int(2 * table_bytes + 8 * out_block_bytes + (4 << 20)),
                112 << 20)

        out = pl.pallas_call(
            functools.partial(_resident_gather_kernel, block_rows=TB),
            out_shape=jax.ShapeDtypeStruct((B_pad, H), table.dtype),
            grid_spec=pltpu.PrefetchScalarGridSpec(
                num_scalar_prefetch=1,            # labels -> SMEM
                grid=(B_pad // TB,),
                in_specs=[
                    # Whole table as one block; constant index => resident.
                    pl.BlockSpec((L, H), lambda b, labels: (0, 0)),
                ],
                out_specs=pl.BlockSpec((TB, H), lambda b, labels: (b, 0)),
            ),
            compiler_params=pltpu.CompilerParams(**cp_kwargs),
        )(labels_i32, table)
        return out[:B]

    # --- Fallback: per-row BlockSpec-driven gather (table too big for VMEM) -
    table_3d = table.reshape(L, 1, H)
    out = pl.pallas_call(
        _rowdma_gather_kernel,
        out_shape=jax.ShapeDtypeStruct((B, 1, H), table.dtype),
        grid_spec=pltpu.PrefetchScalarGridSpec(
            num_scalar_prefetch=1,
            grid=(B,),
            in_specs=[
                pl.BlockSpec((1, 1, H), lambda i, labels: (labels[i], 0, 0),
                             pipeline_mode=pl.Buffered(3)),
            ],
            out_specs=pl.BlockSpec((1, 1, H), lambda i, labels: (i, 0, 0)),
        ),
        compiler_params=pltpu.CompilerParams(
            dimension_semantics=("arbitrary",)),
    )(labels_i32, table_3d)
    return out.reshape(B, H)


class SALSTM:
    """JAX/Pallas port of the reference SALSTM module."""

    def __init__(self, input_size, hidden_size, bidirectional, dropout,
                 num_layers, label_num, *, key):
        self.input_size = input_size
        self.hidden_size = hidden_size
        self.bidirectional = bidirectional
        self.dropout = dropout
        self.num_layers = num_layers
        self.label_num = label_num
        # nn.Embedding default init: N(0, 1) of shape (label_num, hidden_size).
        self.label_embedding = jax.random.normal(
            key, (label_num, hidden_size), dtype=jnp.float32)

    def forward(self):
        # Faithful to the reference: forward() performs no computation.
        # TODO(synk): reference forward() body is `return` (returns None); no
        # LSTM is ever instantiated, so the embedding lookup kernel above is
        # the only meaningful compute exposed by this module.
        return None

    def embed_labels(self, labels):
        """Pallas-kernel embedding lookup for the module's label_embedding."""
        return pallas_embedding_lookup(labels, self.label_embedding)


if __name__ == "__main__":
    key = jax.random.PRNGKey(0)
    k_emb, k_lbl = jax.random.split(key)

    input_size = 16
    hidden_size = 128          # lane-dense output width
    label_num = 8
    batch = 8                  # one full (8, 128) output tile, single grid step

    model = SALSTM(input_size=input_size, hidden_size=hidden_size,
                   bidirectional=True, dropout=0.1, num_layers=1,
                   label_num=label_num, key=k_emb)

    # Reference forward(): returns None.
    assert model.forward() is None

    # Exercise the resident-table Pallas gather on the module's parameter.
    labels = jax.random.randint(k_lbl, (batch,), 0, label_num, dtype=jnp.int32)
    out = model.embed_labels(labels)
    out = jax.block_until_ready(out)

    # Cross-check against plain-JAX gather.
    ref = model.label_embedding[labels]
    assert out.shape == (batch, hidden_size)
    assert jnp.allclose(out, ref, atol=1e-6), "mismatch vs reference gather"

    print("KERNEL_OK")
</pallas_src>

<mosaic_0001>
module attributes {stable_mosaic.version = 11 : i64} {
  func.func @_resident_gather_kernel(%arg0: i32, %arg1: memref<8xi32, #tpu.memory_space<smem>>, %arg2: memref<8x128xf32, #tpu.memory_space<vmem>>, %arg3: memref<8x128xf32, #tpu.memory_space<vmem>>) attributes {dimension_semantics = [#tpu.dimension_semantics<parallel>], iteration_bounds = array<i64: 1>, scalar_prefetch = 1 : i64, scratch_operands = 0 : i64, tpu.core_type = #tpu.core_type<tc>, window_params = [{pipeline_mode = #tpu.pipeline_mode<synchronous>, transform_indices = @transform_0, window_bounds = array<i64: 8, 128>}, {transform_indices = @transform_1, window_bounds = array<i64: 8, 128>}]} {
    %c8_i32 = arith.constant 8 : i32
    %0 = arith.muli %arg0, %c8_i32 : i32
    %c0_i32 = arith.constant 0 : i32
    %1 = arith.addi %0, %c0_i32 : i32
    %2 = arith.index_cast %1 : i32 to index
    %3 = memref.load %arg1[%2] : memref<8xi32, #tpu.memory_space<smem>>
    %4 = arith.index_cast %3 : i32 to index
    %c0 = arith.constant 0 : index
    %5 = vector.load %arg2[%4, %c0] : memref<8x128xf32, #tpu.memory_space<vmem>>, vector<1x128xf32>
    %c8_i32_0 = arith.constant 8 : i32
    %6 = arith.muli %arg0, %c8_i32_0 : i32
    %c1_i32 = arith.constant 1 : i32
    %7 = arith.addi %6, %c1_i32 : i32
    %8 = arith.index_cast %7 : i32 to index
    %9 = memref.load %arg1[%8] : memref<8xi32, #tpu.memory_space<smem>>
    %10 = arith.index_cast %9 : i32 to index
    %c0_1 = arith.constant 0 : index
    %11 = vector.load %arg2[%10, %c0_1] : memref<8x128xf32, #tpu.memory_space<vmem>>, vector<1x128xf32>
    %c8_i32_2 = arith.constant 8 : i32
    %12 = arith.muli %arg0, %c8_i32_2 : i32
    %c2_i32 = arith.constant 2 : i32
    %13 = arith.addi %12, %c2_i32 : i32
    %14 = arith.index_cast %13 : i32 to index
    %15 = memref.load %arg1[%14] : memref<8xi32, #tpu.memory_space<smem>>
    %16 = arith.index_cast %15 : i32 to index
    %c0_3 = arith.constant 0 : index
    %17 = vector.load %arg2[%16, %c0_3] : memref<8x128xf32, #tpu.memory_space<vmem>>, vector<1x128xf32>
    %c8_i32_4 = arith.constant 8 : i32
    %18 = arith.muli %arg0, %c8_i32_4 : i32
    %c3_i32 = arith.constant 3 : i32
    %19 = arith.addi %18, %c3_i32 : i32
    %20 = arith.index_cast %19 : i32 to index
    %21 = memref.load %arg1[%20] : memref<8xi32, #tpu.memory_space<smem>>
    %22 = arith.index_cast %21 : i32 to index
    %c0_5 = arith.constant 0 : index
    %23 = vector.load %arg2[%22, %c0_5] : memref<8x128xf32, #tpu.memory_space<vmem>>, vector<1x128xf32>
    %c8_i32_6 = arith.constant 8 : i32
    %24 = arith.muli %arg0, %c8_i32_6 : i32
    %c4_i32 = arith.constant 4 : i32
    %25 = arith.addi %24, %c4_i32 : i32
    %26 = arith.index_cast %25 : i32 to index
    %27 = memref.load %arg1[%26] : memref<8xi32, #tpu.memory_space<smem>>
    %28 = arith.index_cast %27 : i32 to index
    %c0_7 = arith.constant 0 : index
    %29 = vector.load %arg2[%28, %c0_7] : memref<8x128xf32, #tpu.memory_space<vmem>>, vector<1x128xf32>
    %c8_i32_8 = arith.constant 8 : i32
    %30 = arith.muli %arg0, %c8_i32_8 : i32
    %c5_i32 = arith.constant 5 : i32
    %31 = arith.addi %30, %c5_i32 : i32
    %32 = arith.index_cast %31 : i32 to index
    %33 = memref.load %arg1[%32] : memref<8xi32, #tpu.memory_space<smem>>
    %34 = arith.index_cast %33 : i32 to index
    %c0_9 = arith.constant 0 : index
    %35 = vector.load %arg2[%34, %c0_9] : memref<8x128xf32, #tpu.memory_space<vmem>>, vector<1x128xf32>
    %c8_i32_10 = arith.constant 8 : i32
    %36 = arith.muli %arg0, %c8_i32_10 : i32
    %c6_i32 = arith.constant 6 : i32
    %37 = arith.addi %36, %c6_i32 : i32
    %38 = arith.index_cast %37 : i32 to index
    %39 = memref.load %arg1[%38] : memref<8xi32, #tpu.memory_space<smem>>
    %40 = arith.index_cast %39 : i32 to index
    %c0_11 = arith.constant 0 : index
    %41 = vector.load %arg2[%40, %c0_11] : memref<8x128xf32, #tpu.memory_space<vmem>>, vector<1x128xf32>
    %c8_i32_12 = arith.constant 8 : i32
    %42 = arith.muli %arg0, %c8_i32_12 : i32
    %c7_i32 = arith.constant 7 : i32
    %43 = arith.addi %42, %c7_i32 : i32
    %44 = arith.index_cast %43 : i32 to index
    %45 = memref.load %arg1[%44] : memref<8xi32, #tpu.memory_space<smem>>
    %46 = arith.index_cast %45 : i32 to index
    %c0_13 = arith.constant 0 : index
    %47 = vector.load %arg2[%46, %c0_13] : memref<8x128xf32, #tpu.memory_space<vmem>>, vector<1x128xf32>
    %48 = tpu.concatenate %5, %11, %17, %23, %29, %35, %41, %47 in 0 : vector<1x128xf32>, vector<1x128xf32>, vector<1x128xf32>, vector<1x128xf32>, vector<1x128xf32>, vector<1x128xf32>, vector<1x128xf32>, vector<1x128xf32> -> vector<8x128xf32>
    %c0_14 = arith.constant 0 : index
    %c0_15 = arith.constant 0 : index
    %49 = vector.load %arg3[%c0_14, %c0_15] : memref<8x128xf32, #tpu.memory_space<vmem>>, vector<8x128xf32>
    tpu.vector_store %arg3[%c0_14, %c0_15], %48 {strides = array<i32>} : memref<8x128xf32, #tpu.memory_space<vmem>>, vector<8x128xf32>,
    return
  }
  func.func @transform_0(%arg0: i32, %arg1: memref<8xi32, #tpu.memory_space<smem>>) -> (i32, i32) {
    %c0_i32 = arith.constant 0 : i32
    %c0_i32_0 = arith.constant 0 : i32
    %c0_i32_1 = arith.constant 0 : i32
    return %c0_i32, %c0_i32_0 : i32, i32
  }
  func.func @transform_1(%arg0: i32, %arg1: memref<8xi32, #tpu.memory_space<smem>>) -> (i32, i32) {
    %c0_i32 = arith.constant 0 : i32
    %c0_i32_0 = arith.constant 0 : i32
    return %arg0, %c0_i32 : i32, i32
  }
}

</mosaic_0001>

<llo_original>
// kernel: tpu_custom_call.1
$region0: #{tpu_custom_call.1}
  #allocation0 [shape = 'u32[]', space=smem, size = 0x4, offset = 0x4, fixed_abs, tag = 'smem constant byte address 0x4 - core index']
  #allocation1 [shape = 'u32[72,128]{1,0:T(1,128)}', space=vmem, size = 0x9000, scoped, tag = 'internal scratch']
  #allocation2 [shape = 's32[1]{0}', space=sflag, size = 0x4, scoped, tag = 'scoped memory for tpu_custom_call.1']
  #allocation3 [shape = 'u8[512]{0}', space=smem, size = 0x200, scoped, tag = 'prefetched SMEM operand 0']
  %s0 = inlined_call_operand.hbm [shape: s32[8], index: 0, kind: input, shape index: {}]
  %s1 = inlined_call_operand.hbm [shape: f32[8,128], index: 1, kind: input, shape index: {}]
  %s2 = inlined_call_operand.hbm [shape: f32[8,128], index: 2, kind: output, shape index: {}]
  %s3 = sld [smem:[#allocation0]]
  $region18: #{tpu_custom_call.1} parent=0
    _
  %s5 = ssub.s32 1, %s3
  %s6 = scalar_select 0, %s5, %s3
  %s8 = sshll.u32 %s0, 4
  %s9 = int_to_ptr.hbm [resolvable:$true] %s8
  %11 = dma.hbm_to_smem %s9, 16, [#allocation3], [#allocation2]
  %13 = dma.done [#allocation2], 16
  %14 = sfence
  $region1: #{tpu_custom_call.1} parent=0
    #allocation4 [shape = 'u8[4096]{0}', space=vmem, size = 0x1000, scoped, tag = 'input window, operand 1, single buffered']
    #allocation5 [shape = 's32[1]{0}', space=sflag, size = 0x4, scoped, tag = 'scoped memory for tpu_custom_call.1']
    #allocation6 [shape = 's32[1]{0}', space=sflag, size = 0x4, scoped, tag = 'scoped memory for tpu_custom_call.1']
    #allocation7 [shape = 'u8[4096]{0}', space=vmem, size = 0x1000, scoped, tag = 'output window, operand 0, single buffered']
    %15 = vsyncpa [#allocation5], 0
    %16 = vsyncpa [#allocation6], 0
    // Predicated region
    $region2: #{tpu_custom_call.1} parent=1 // pred_check
      _
    $region3: #{tpu_custom_call.1} parent=1 // pred_check_branch
      %18 = sbr.rel (0) target = $region5
    $region4: #{tpu_custom_call.1} parent=1 // pred_region
      %20 = vsyncadd [#allocation5], 0
      %s22 = sshll.u32 %s1, 4
      %s23 = int_to_ptr.hbm [resolvable:$true] %s22
      %s24 = sshll.u32 [#allocation4], 4
      %s25 = int_to_ptr.vmem [resolvable:$true] %s24
      %27 = dma.hbm_to_vmem [thread:$0]  %s23, 128, %s25, [#allocation5]
    $region5: #{tpu_custom_call.1} parent=1 // pred_fallthru
      _
    // Predicated region
    $region6: #{tpu_custom_call.1} parent=1 // pred_check
      _
    $region7: #{tpu_custom_call.1} parent=1 // pred_check_branch
      %29 = sbr.rel (0) target = $region9
    $region8: #{tpu_custom_call.1} parent=1 // pred_region
      %31 = dma.done [#allocation5], 128
    $region9: #{tpu_custom_call.1} parent=1 // pred_fallthru
      _
    %s32 = smul.u32 0, 8
    %s33 = sld [smem:[#allocation3 + %s32]]
    %s34 = scalar_lea.vmem [#allocation4], %s33
    %v35 = vld [vmem:[%s34] sm:$0x1]
    %s36 = sadd.s32 %s32, 1
    %s37 = sld [smem:[#allocation3 + %s36]]
    %s38 = scalar_lea.vmem [#allocation4], %s37
    %v39 = vld [vmem:[%s38] sm:$0x1]
    %s40 = sadd.s32 %s32, 2
    %s41 = sld [smem:[#allocation3 + %s40]]
    %s42 = scalar_lea.vmem [#allocation4], %s41
    %v43 = vld [vmem:[%s42] sm:$0x1]
    %s44 = sadd.s32 %s32, 3
    %s45 = sld [smem:[#allocation3 + %s44]]
    %s46 = scalar_lea.vmem [#allocation4], %s45
    %v47 = vld [vmem:[%s46] sm:$0x1]
    %s48 = sadd.s32 %s32, 4
    %s49 = sld [smem:[#allocation3 + %s48]]
    %s50 = scalar_lea.vmem [#allocation4], %s49
    %v51 = vld [vmem:[%s50] sm:$0x1]
    %s52 = sadd.s32 %s32, 5
    %s53 = sld [smem:[#allocation3 + %s52]]
    %s54 = scalar_lea.vmem [#allocation4], %s53
    %v55 = vld [vmem:[%s54] sm:$0x1]
    %s56 = sadd.s32 %s32, 6
    %s57 = sld [smem:[#allocation3 + %s56]]
    %s58 = scalar_lea.vmem [#allocation4], %s57
    %v59 = vld [vmem:[%s58] sm:$0x1]
    %s60 = sadd.s32 %s32, 7
    %s61 = sld [smem:[#allocation3 + %s60]]
    %s62 = scalar_lea.vmem [#allocation4], %s61
    %v63 = vld [vmem:[%s62] sm:$0x1]
    %v65 = vrot.slane %v39, 7
    %v68 = vrot.slane %v43, 6
    %v71 = vrot.slane %v47, 5
    %v74 = vrot.slane %v51, 4
    %v77 = vrot.slane %v55, 3
    %v80 = vrot.slane %v59, 2
    %v83 = vrot.slane %v63, 1
    %vm85 = vcmask 1040384
    %v86 = vsel %vm85, %v35, %v65
    %vm87 = vcmask 1041408
    %v88 = vsel %vm87, %v86, %v68
    %vm89 = vcmask 1042432
    %v90 = vsel %vm89, %v88, %v71
    %vm91 = vcmask 1043456
    %v92 = vsel %vm91, %v90, %v74
    %vm93 = vcmask 1044480
    %v94 = vsel %vm93, %v92, %v77
    %vm95 = vcmask 1045504
    %v96 = vsel %vm95, %v94, %v80
    %vm97 = vcmask 1046528
    %v98 = vsel %vm97, %v96, %v83
    %99 = vst [vmem:[#allocation7] sm:$0xff] %v98
    // Predicated region
    $region10: #{tpu_custom_call.1} parent=1 // pred_check
      _
    $region11: #{tpu_custom_call.1} parent=1 // pred_check_branch
      %101 = sbr.rel (0) target = $region13
    $region12: #{tpu_custom_call.1} parent=1 // pred_region
      %103 = vsyncadd [#allocation6], 0
      %s105 = sshll.u32 [#allocation7], 4
      %s106 = int_to_ptr.vmem [resolvable:$true] %s105
      %s107 = sshll.u32 %s2, 4
      %s108 = int_to_ptr.hbm [resolvable:$true] %s107
      %110 = dma.vmem_to_hbm [thread:$0]  %s106, 128, %s108, [#allocation6]
    $region13: #{tpu_custom_call.1} parent=1 // pred_fallthru
      _
    // Predicated region
    $region14: #{tpu_custom_call.1} parent=1 // pred_check
      _
    $region15: #{tpu_custom_call.1} parent=1 // pred_check_branch
      %112 = sbr.rel (0) target = $region17
    $region16: #{tpu_custom_call.1} parent=1 // pred_region
      %114 = dma.done [#allocation6], 128
    $region17: #{tpu_custom_call.1} parent=1 // pred_fallthru
      _
    %115 = vsyncpa [#allocation5], 1
    %116 = vsyncpa [#allocation6], 1

</llo_original>
